<compile_context>
chip_gen: v6e
topology: v6e:2x2x1
jax: 0.10.0
libtpu: 0.0.40
codegen_flags: <defaults>
</compile_context>

<pallas_src>
import jax
import jax.numpy as jnp
from jax.experimental import pallas as pl
from jax.experimental.pallas import tpu as pltpu

HIDDEN = 768          # self.hidden_size in the PyTorch module
MLP_DIM = 256         # first Linear of every ClassificationHead
LANE_PAD = 128        # pad tiny class counts up to one lane-width
SUBLANE = 8           # batch rows are padded to a multiple of this

HEAD_CLASSES = {
    "category": 8,
    "intensity": 11,
    "concern": 11,
    "polarity": 3,
}
NUM_HEADS = len(HEAD_CLASSES)


def _fused_heads_kernel(x_ref, w1_ref, b1_ref, w2_ref, b2_ref, o_ref):
    """One ClassificationHead per grid step:
       Linear(768,256) -> ReLU -> (Dropout=id) -> Linear(256, C_pad=128)."""
    x = x_ref[...].astype(jnp.bfloat16)                           # [Bp, 768]
    h = jnp.dot(x, w1_ref[...], preferred_element_type=jnp.float32)
    h = jnp.maximum(h + b1_ref[...], 0.0)                         # [Bp, 256] f32
    o = jnp.dot(h.astype(jnp.bfloat16), w2_ref[...],
                preferred_element_type=jnp.float32)
    o_ref[...] = o + b2_ref[...]                                  # [Bp, 128] f32


@jax.jit
def multi_label_classifier_forward(embeddings, packed):
    """Forward of MultiLabelClassifier given encoder embeddings [B, 768]."""
    # top-level self.dropout is identity at inference
    w1_all, b1_all, w2_all, b2_all = packed
    B = embeddings.shape[0]
    Bp = ((B + SUBLANE - 1) // SUBLANE) * SUBLANE   # pad batch to sublane multiple
    if Bp != B:
        embeddings = jnp.pad(embeddings, ((0, Bp - B), (0, 0)))

    out = pl.pallas_call(
        _fused_heads_kernel,
        out_shape=jax.ShapeDtypeStruct((NUM_HEADS, Bp, LANE_PAD), jnp.float32),
        grid=(NUM_HEADS,),
        in_specs=[
            # same embedding block for every head (Pallas copies it once)
            pl.BlockSpec((Bp, HIDDEN), lambda h: (0, 0)),
            # per-head weight/bias blocks; leading head dim squeezed away
            pl.BlockSpec((None, HIDDEN, MLP_DIM), lambda h: (h, 0, 0)),
            pl.BlockSpec((None, 1, MLP_DIM), lambda h: (h, 0, 0)),
            pl.BlockSpec((None, MLP_DIM, LANE_PAD), lambda h: (h, 0, 0)),
            pl.BlockSpec((None, 1, LANE_PAD), lambda h: (h, 0, 0)),
        ],
        out_specs=pl.BlockSpec((None, Bp, LANE_PAD), lambda h: (h, 0, 0)),
        compiler_params=pltpu.CompilerParams(
            dimension_semantics=("parallel",)),   # 2-TC chips: 2 heads per core
    )(embeddings, w1_all, b1_all, w2_all, b2_all)
    return {name: out[i, :B, :c]
            for i, (name, c) in enumerate(HEAD_CLASSES.items())}


def init_head_params(key, input_size, num_classes):
    """Deterministic init mirroring nn.Linear shapes (stored transposed: [in, out])."""
    k1, k2, k3, k4 = jax.random.split(key, 4)
    s1 = 1.0 / jnp.sqrt(input_size)
    s2 = 1.0 / jnp.sqrt(MLP_DIM)
    w1 = jax.random.uniform(k1, (input_size, MLP_DIM), jnp.float32, -s1, s1)
    b1 = jax.random.uniform(k2, (MLP_DIM,), jnp.float32, -s1, s1)
    w2 = jax.random.uniform(k3, (MLP_DIM, num_classes), jnp.float32, -s2, s2)
    b2 = jax.random.uniform(k4, (num_classes,), jnp.float32, -s2, s2)
    return w1, b1, w2, b2


def pack_params(params):
    """Stack per-head params along a leading head axis; pad class dim to 128
    lanes once here (not per call); cast weights to bf16 for halved HBM traffic."""
    names = list(HEAD_CLASSES.keys())
    w1_all = jnp.stack([params[n][0] for n in names]).astype(jnp.bfloat16)
    b1_all = jnp.stack([params[n][1].reshape(1, MLP_DIM) for n in names])
    w2_all = jnp.stack([
        jnp.pad(params[n][2], ((0, 0), (0, LANE_PAD - HEAD_CLASSES[n])))
        for n in names
    ]).astype(jnp.bfloat16)
    b2_all = jnp.stack([
        jnp.pad(params[n][3], ((0, LANE_PAD - HEAD_CLASSES[n]),)).reshape(1, LANE_PAD)
        for n in names
    ])
    return w1_all, b1_all, w2_all, b2_all


if __name__ == "__main__":
    key = jax.random.PRNGKey(0)
    k_emb, k_params = jax.random.split(key)

    B = 8  # small batch of "sentences"
    embeddings = jax.random.normal(k_emb, (B, HIDDEN), jnp.float32)

    head_keys = jax.random.split(k_params, NUM_HEADS)
    params = {
        name: init_head_params(hk, HIDDEN, c)
        for hk, (name, c) in zip(head_keys, HEAD_CLASSES.items())
    }
    packed = pack_params(params)

    outputs = multi_label_classifier_forward(embeddings, packed)
    outputs = jax.tree_util.tree_map(jax.block_until_ready, outputs)

    # sanity: reference check against plain JAX using the same bf16 weights /
    # f32 accumulation (tight tol), plus a loose check vs. the pure-f32 math.
    w1_all, b1_all, w2_all, b2_all = packed
    xb = embeddings.astype(jnp.bfloat16)
    for i, (name, c) in enumerate(HEAD_CLASSES.items()):
        assert outputs[name].shape == (B, c), (name, outputs[name].shape)

        h_ref = jnp.maximum(
            jnp.dot(xb, w1_all[i], preferred_element_type=jnp.float32)
            + b1_all[i], 0.0)
        ref_bf16 = (jnp.dot(h_ref.astype(jnp.bfloat16), w2_all[i],
                            preferred_element_type=jnp.float32)
                    + b2_all[i])[:, :c]
        assert jnp.allclose(outputs[name], ref_bf16, atol=1e-3, rtol=1e-3), name

        w1, b1, w2, b2 = params[name]
        ref_f32 = jnp.maximum(embeddings @ w1 + b1, 0.0) @ w2 + b2
        assert jnp.allclose(outputs[name], ref_f32, atol=1e-1, rtol=1e-1), name

    print("KERNEL_OK")
</pallas_src>

<mosaic_0001>
module attributes {stable_mosaic.version = 11 : i64} {
  func.func @_fused_heads_kernel(%arg0: i32, %arg1: memref<8x768xf32, #tpu.memory_space<vmem>>, %arg2: memref<1x768x256xbf16, #tpu.memory_space<vmem>>, %arg3: memref<1x1x256xf32, #tpu.memory_space<vmem>>, %arg4: memref<1x256x128xbf16, #tpu.memory_space<vmem>>, %arg5: memref<1x1x128xf32, #tpu.memory_space<vmem>>, %arg6: memref<1x8x128xf32, #tpu.memory_space<vmem>>) attributes {dimension_semantics = [#tpu.dimension_semantics<parallel>], iteration_bounds = array<i64: 4>, scalar_prefetch = 0 : i64, scratch_operands = 0 : i64, tpu.core_type = #tpu.core_type<tc>, window_params = [{pipeline_mode = #tpu.pipeline_mode<synchronous>, transform_indices = @transform_0, window_bounds = array<i64: 8, 768>}, {transform_indices = @transform_1, window_bounds = array<i64: 1, 768, 256>}, {transform_indices = @transform_2, window_bounds = array<i64: 1, 1, 256>}, {transform_indices = @transform_3, window_bounds = array<i64: 1, 256, 128>}, {transform_indices = @transform_4, window_bounds = array<i64: 1, 1, 128>}, {transform_indices = @transform_5, window_bounds = array<i64: 1, 8, 128>}]} {
    %c0 = arith.constant 0 : index
    %c0_0 = arith.constant 0 : index
    %0 = vector.load %arg1[%c0, %c0_0] : memref<8x768xf32, #tpu.memory_space<vmem>>, vector<8x768xf32>
    %1 = arith.truncf %0 : vector<8x768xf32> to vector<8x768xbf16>
    %c0_1 = arith.constant 0 : index
    %c0_2 = arith.constant 0 : index
    %c0_3 = arith.constant 0 : index
    %2 = vector.load %arg2[%c0_1, %c0_2, %c0_3] : memref<1x768x256xbf16, #tpu.memory_space<vmem>>, vector<1x768x256xbf16>
    %3 = vector.shape_cast %2 : vector<1x768x256xbf16> to vector<768x256xbf16>
    %cst = arith.constant dense<0.000000e+00> : vector<8x256xf32>
    %4 = tpu.matmul %1, %3, %cst {dimension_numbers = #tpu.dot_dimension_numbers<[1], [0], [0], [1], [0, 0, 1, 1], [], []>} : vector<8x768xbf16>, vector<768x256xbf16>, vector<8x256xf32> -> vector<8x256xf32>
    %c0_4 = arith.constant 0 : index
    %c0_5 = arith.constant 0 : index
    %c0_6 = arith.constant 0 : index
    %5 = vector.load %arg3[%c0_4, %c0_5, %c0_6] : memref<1x1x256xf32, #tpu.memory_space<vmem>>, vector<1x1x256xf32>
    %6 = vector.shape_cast %5 : vector<1x1x256xf32> to vector<1x256xf32>
    %7 = vector.broadcast %6 : vector<1x256xf32> to vector<8x256xf32>
    %8 = arith.addf %4, %7 : vector<8x256xf32>
    %cst_7 = arith.constant 0.000000e+00 : f32
    %9 = vector.broadcast %cst_7 : f32 to vector<8x256xf32>
    %10 = arith.maximumf %8, %9 : vector<8x256xf32>
    %11 = arith.truncf %10 : vector<8x256xf32> to vector<8x256xbf16>
    %c0_8 = arith.constant 0 : index
    %c0_9 = arith.constant 0 : index
    %c0_10 = arith.constant 0 : index
    %12 = vector.load %arg4[%c0_8, %c0_9, %c0_10] : memref<1x256x128xbf16, #tpu.memory_space<vmem>>, vector<1x256x128xbf16>
    %13 = vector.shape_cast %12 : vector<1x256x128xbf16> to vector<256x128xbf16>
    %cst_11 = arith.constant dense<0.000000e+00> : vector<8x128xf32>
    %14 = tpu.matmul %11, %13, %cst_11 {dimension_numbers = #tpu.dot_dimension_numbers<[1], [0], [0], [1], [0, 0, 1, 1], [], []>} : vector<8x256xbf16>, vector<256x128xbf16>, vector<8x128xf32> -> vector<8x128xf32>
    %c0_12 = arith.constant 0 : index
    %c0_13 = arith.constant 0 : index
    %c0_14 = arith.constant 0 : index
    %15 = vector.load %arg5[%c0_12, %c0_13, %c0_14] : memref<1x1x128xf32, #tpu.memory_space<vmem>>, vector<1x1x128xf32>
    %16 = vector.shape_cast %15 : vector<1x1x128xf32> to vector<1x128xf32>
    %17 = vector.broadcast %16 : vector<1x128xf32> to vector<8x128xf32>
    %18 = arith.addf %14, %17 : vector<8x128xf32>
    %c0_15 = arith.constant 0 : index
    %c0_16 = arith.constant 0 : index
    %c0_17 = arith.constant 0 : index
    %19 = vector.load %arg6[%c0_15, %c0_16, %c0_17] : memref<1x8x128xf32, #tpu.memory_space<vmem>>, vector<1x8x128xf32>
    %20 = vector.shape_cast %19 : vector<1x8x128xf32> to vector<8x128xf32>
    %21 = vector.shape_cast %18 : vector<8x128xf32> to vector<1x8x128xf32>
    tpu.vector_store %arg6[%c0_15, %c0_16, %c0_17], %21 {strides = array<i32>} : memref<1x8x128xf32, #tpu.memory_space<vmem>>, vector<1x8x128xf32>,
    return
  }
  func.func @transform_0(%arg0: i32) -> (i32, i32) {
    %c0_i32 = arith.constant 0 : i32
    %c0_i32_0 = arith.constant 0 : i32
    %c0_i32_1 = arith.constant 0 : i32
    return %c0_i32, %c0_i32_0 : i32, i32
  }
  func.func @transform_1(%arg0: i32) -> (i32, i32, i32) {
    %c0_i32 = arith.constant 0 : i32
    %c0_i32_0 = arith.constant 0 : i32
    %c0_i32_1 = arith.constant 0 : i32
    return %arg0, %c0_i32, %c0_i32_0 : i32, i32, i32
  }
  func.func @transform_2(%arg0: i32) -> (i32, i32, i32) {
    %c0_i32 = arith.constant 0 : i32
    %c0_i32_0 = arith.constant 0 : i32
    %c0_i32_1 = arith.constant 0 : i32
    return %arg0, %c0_i32, %c0_i32_0 : i32, i32, i32
  }
  func.func @transform_3(%arg0: i32) -> (i32, i32, i32) {
    %c0_i32 = arith.constant 0 : i32
    %c0_i32_0 = arith.constant 0 : i32
    %c0_i32_1 = arith.constant 0 : i32
    return %arg0, %c0_i32, %c0_i32_0 : i32, i32, i32
  }
  func.func @transform_4(%arg0: i32) -> (i32, i32, i32) {
    %c0_i32 = arith.constant 0 : i32
    %c0_i32_0 = arith.constant 0 : i32
    %c0_i32_1 = arith.constant 0 : i32
    return %arg0, %c0_i32, %c0_i32_0 : i32, i32, i32
  }
  func.func @transform_5(%arg0: i32) -> (i32, i32, i32) {
    %c0_i32 = arith.constant 0 : i32
    %c0_i32_0 = arith.constant 0 : i32
    %c0_i32_1 = arith.constant 0 : i32
    return %arg0, %c0_i32, %c0_i32_0 : i32, i32, i32
  }
}

</mosaic_0001>

<llo_original>
// kernel: multi_label_classifier_forward.1
$region0: #{multi_label_classifier_forward.1}
  #allocation0 [shape = 'u32[]', space=smem, size = 0x4, offset = 0x4, fixed_abs, tag = 'smem constant byte address 0x4 - core index']
  #allocation1 [shape = 'u32[144,128]{1,0:T(1,128)}', space=vmem, size = 0x12000, scoped, tag = 'internal scratch']
  %s0 = inlined_call_operand.hbm [shape: f32[8,768], index: 0, kind: input, shape index: {}]
  %s1 = inlined_call_operand.hbm [shape: bf16[4,768,256], index: 1, kind: input, shape index: {}]
  %s2 = inlined_call_operand.hbm [shape: f32[4,1,256], index: 2, kind: input, shape index: {}]
  %s3 = inlined_call_operand.hbm [shape: bf16[4,256,128], index: 3, kind: input, shape index: {}]
  %s4 = inlined_call_operand.hbm [shape: f32[4,1,128], index: 4, kind: input, shape index: {}]
  %s5 = inlined_call_operand.vmem [shape: f32[4,8,128], index: 5, kind: output, shape index: {}]
  %s6 = sld [smem:[#allocation0]]
  $region73: #{multi_label_classifier_forward.1} parent=0
    _
  %s8 = ssub.s32 1, %s6
  %s9 = scalar_select 0, %s8, %s6
  $region1: #{multi_label_classifier_forward.1} parent=0
    #allocation2 [shape = 'u8[24576]{0}', space=vmem, size = 0x6000, scoped, tag = 'input window, operand 0, single buffered']
    #allocation3 [shape = 's32[2]{0}', space=sflag, size = 0x8, scoped, tag = 'scoped memory for multi_label_classifier_forward.1']
    #allocation4 [shape = 'u8[786432]{0}', space=vmem, size = 0xc0000, scoped, tag = 'input window, operand 1']
    #allocation5 [shape = 's32[2]{0}', space=sflag, size = 0x8, scoped, tag = 'scoped memory for multi_label_classifier_forward.1']
    #allocation6 [shape = 'u8[2048]{0}', space=vmem, size = 0x800, scoped, tag = 'input window, operand 2']
    #allocation7 [shape = 'u8[131072]{0}', space=vmem, size = 0x20000, scoped, tag = 'input window, operand 3']
    #allocation8 [shape = 's32[2]{0}', space=sflag, size = 0x8, scoped, tag = 'scoped memory for multi_label_classifier_forward.1']
    #allocation9 [shape = 'u8[1024]{0}', space=vmem, size = 0x400, scoped, tag = 'input window, operand 4']
    %10 = vsyncpa [#allocation3], 0
    %11 = vsyncpa [#allocation5], 0
    %s12 = scalar_lea.sflag [#allocation5], 1
    %13 = vsyncpa %s12, 0
    %14 = vsyncpa [#allocation8], 0
    %s15 = scalar_lea.sflag [#allocation8], 1
    %16 = vsyncpa %s15, 0
    loop: start=0, step=1, limit=6
    $region2: #{multi_label_classifier_forward.1} parent=1 // loop_pre_header
      _
    $region3: #{multi_label_classifier_forward.1} parent=1 // loop_header
      %s18 = sphi 0, %s22
      %p19 = scmp.ge.s32.totalorder %s18, 6
      %s26 = sphi 0, %s26
      %s28 = sphi 0, %s26
      %s29 = sphi 0, %s28
      %s43 = sphi 0, %s29
      %s49 = sphi 0, %s51
      %s52 = sphi 0, %s49
      %s53 = sphi 0, %s52
      %s69 = sphi 0, %s53
      %s75 = sphi 0, %s77
      %s78 = sphi 0, %s75
      %s79 = sphi 0, %s78
      %s95 = sphi 0, %s79
      %s101 = sphi 0, %s103
      %s104 = sphi 0, %s101
      %s105 = sphi 0, %s104
      %s121 = sphi 0, %s105
      %s127 = sphi 0, %s129
      %s130 = sphi 0, %s127
      %s131 = sphi 0, %s130
      %s147 = sphi 0, %s131
      %s153 = sphi 0, %s155
      %s156 = sphi 0, %s153
      %s157 = sphi 0, %s156
      %s173 = sphi 0, %s157
    $region4: #{multi_label_classifier_forward.1} parent=1 // loop_header_branch
      %21 = sbr.rel (%p19) target = $region8
    $region5: #{multi_label_classifier_forward.1} parent=1 // loop_body
      %s23 = ssub.s32 %s18, 1
      %s24 = ssub.s32 %s18, 2
      %s25 = sadd.s32 %s18, 1
      %s27 = sadd.s32 %s26, 1
      %p30 = scmp.eq.s32.totalorder %s18, 3
      %p31 = scmp.ne.s32.totalorder %s26, %s28
      %p32 = scmp.eq.s32.totalorder %s18, 0
      %p33 = por %p31, %p32
      %p34 = scmp.ne.s32.totalorder %s26, %s28
      %p35 = scmp.eq.s32.totalorder %s23, 3
      %p36 = por %p34, %p35
      %p37 = scmp.ne.s32.totalorder %s28, %s29
      %p38 = scmp.eq.s32.totalorder %s23, 0
      %p39 = por %p37, %p38
      %p40 = scmp.ne.s32.totalorder %s28, %s29
      %p41 = scmp.eq.s32.totalorder %s24, 3
      %p42 = por %p40, %p41
      %p44 = scmp.ne.s32.totalorder %s29, %s43
      %p45 = scmp.eq.s32.totalorder %s24, 0
      %p46 = por %p44, %p45
      %s47 = ssub.s32 %s18, %s25
      %p48 = scmp.eq.s32.totalorder %s47, 0
      %s50 = sadd.s32 %s49, 1
      %s51 = scalar_select %p48, %s49, %s50
      %p54 = pneg %p48
      %p55 = scmp.eq.s32.totalorder %s18, 3
      %p56 = por %p54, %p55
      %p57 = scmp.ne.s32.totalorder %s49, %s52
      %p58 = scmp.eq.s32.totalorder %s18, 0
      %p59 = por %p57, %p58
      %p60 = scmp.ne.s32.totalorder %s49, %s52
      %p61 = scmp.eq.s32.totalorder %s23, 3
      %p62 = por %p60, %p61
      %p63 = scmp.ne.s32.totalorder %s52, %s53
      %p64 = scmp.eq.s32.totalorder %s23, 0
      %p65 = por %p63, %p64
      %p66 = scmp.ne.s32.totalorder %s52, %s53
      %p67 = scmp.eq.s32.totalorder %s24, 3
      %p68 = por %p66, %p67
      %p70 = scmp.ne.s32.totalorder %s53, %s69
      %p71 = scmp.eq.s32.totalorder %s24, 0
      %p72 = por %p70, %p71
      %s73 = ssub.s32 %s18, %s25
      %p74 = scmp.eq.s32.totalorder %s73, 0
      %s76 = sadd.s32 %s75, 1
      %s77 = scalar_select %p74, %s75, %s76
      %p80 = pneg %p74
      %p81 = scmp.eq.s32.totalorder %s18, 3
      %p82 = por %p80, %p81
      %p83 = scmp.ne.s32.totalorder %s75, %s78
      %p84 = scmp.eq.s32.totalorder %s18, 0
      %p85 = por %p83, %p84
      %p86 = scmp.ne.s32.totalorder %s75, %s78
      %p87 = scmp.eq.s32.totalorder %s23, 3
      %p88 = por %p86, %p87
      %p89 = scmp.ne.s32.totalorder %s78, %s79
      %p90 = scmp.eq.s32.totalorder %s23, 0
      %p91 = por %p89, %p90
      %p92 = scmp.ne.s32.totalorder %s78, %s79
      %p93 = scmp.eq.s32.totalorder %s24, 3
      %p94 = por %p92, %p93
      %p96 = scmp.ne.s32.totalorder %s79, %s95
      %p97 = scmp.eq.s32.totalorder %s24, 0
      %p98 = por %p96, %p97
      %s99 = ssub.s32 %s18, %s25
      %p100 = scmp.eq.s32.totalorder %s99, 0
      %s102 = sadd.s32 %s101, 1
      %s103 = scalar_select %p100, %s101, %s102
      %p106 = pneg %p100
      %p107 = scmp.eq.s32.totalorder %s18, 3
      %p108 = por %p106, %p107
      %p109 = scmp.ne.s32.totalorder %s101, %s104
      %p110 = scmp.eq.s32.totalorder %s18, 0
      %p111 = por %p109, %p110
      %p112 = scmp.ne.s32.totalorder %s101, %s104
      %p113 = scmp.eq.s32.totalorder %s23, 3
      %p114 = por %p112, %p113
      %p115 = scmp.ne.s32.totalorder %s104, %s105
      %p116 = scmp.eq.s32.totalorder %s23, 0
      %p117 = por %p115, %p116
      %p118 = scmp.ne.s32.totalorder %s104, %s105
      %p119 = scmp.eq.s32.totalorder %s24, 3
      %p120 = por %p118, %p119
      %p122 = scmp.ne.s32.totalorder %s105, %s121
      %p123 = scmp.eq.s32.totalorder %s24, 0
      %p124 = por %p122, %p123
      %s125 = ssub.s32 %s18, %s25
      %p126 = scmp.eq.s32.totalorder %s125, 0
      %s128 = sadd.s32 %s127, 1
      %s129 = scalar_select %p126, %s127, %s128
      %p132 = pneg %p126
      %p133 = scmp.eq.s32.totalorder %s18, 3
      %p134 = por %p132, %p133
      %p135 = scmp.ne.s32.totalorder %s127, %s130
      %p136 = scmp.eq.s32.totalorder %s18, 0
      %p137 = por %p135, %p136
      %p138 = scmp.ne.s32.totalorder %s127, %s130
      %p139 = scmp.eq.s32.totalorder %s23, 3
      %p140 = por %p138, %p139
      %p141 = scmp.ne.s32.totalorder %s130, %s131
      %p142 = scmp.eq.s32.totalorder %s23, 0
      %p143 = por %p141, %p142
      %p144 = scmp.ne.s32.totalorder %s130, %s131
      %p145 = scmp.eq.s32.totalorder %s24, 3
      %p146 = por %p144, %p145
      %p148 = scmp.ne.s32.totalorder %s131, %s147
      %p149 = scmp.eq.s32.totalorder %s24, 0
      %p150 = por %p148, %p149
      %s151 = ssub.s32 %s18, %s25
      %p152 = scmp.eq.s32.totalorder %s151, 0
      %s154 = sadd.s32 %s153, 1
      %s155 = scalar_select %p152, %s153, %s154
      %p158 = pneg %p152
      %p159 = scmp.eq.s32.totalorder %s18, 3
      %p160 = por %p158, %p159
      %p161 = scmp.ne.s32.totalorder %s153, %s156
      %p162 = scmp.eq.s32.totalorder %s18, 0
      %p163 = por %p161, %p162
      %p164 = scmp.ne.s32.totalorder %s153, %s156
      %p165 = scmp.eq.s32.totalorder %s23, 3
      %p166 = por %p164, %p165
      %p167 = scmp.ne.s32.totalorder %s156, %s157
      %p168 = scmp.eq.s32.totalorder %s23, 0
      %p169 = por %p167, %p168
      %p170 = scmp.ne.s32.totalorder %s156, %s157
      %p171 = scmp.eq.s32.totalorder %s24, 3
      %p172 = por %p170, %p171
      %p174 = scmp.ne.s32.totalorder %s157, %s173
      %p175 = scmp.eq.s32.totalorder %s24, 0
      %p176 = por %p174, %p175
      %p177 = scmp.le.s32.totalorder 1, %s18
      %p178 = scmp.lt.s32.totalorder %s18, 5
      %p179 = pnand %p177, %p178
      %p180 = pneg %p179
      // Predicated region
      $region9: #{multi_label_classifier_forward.1} parent=5 // pred_check
        _
      $region10: #{multi_label_classifier_forward.1} parent=5 // pred_check_branch
        %182 = sbr.rel (%p179) target = $region12
      $region11: #{multi_label_classifier_forward.1} parent=5 // pred_region
        %s183 = ssub.s32 %s18, 1
        // Predicated region
        $region13: #{multi_label_classifier_forward.1} parent=11 // pred_check
          %p184 = pneg %p39
        $region14: #{multi_label_classifier_forward.1} parent=11 // pred_check_branch
          %186 = sbr.rel (%p184) target = $region16
        $region15: #{multi_label_classifier_forward.1} parent=11 // pred_region
          %s188 = ssub.s32 768, 768
          %189 = vsyncadd [#allocation3], %s188
          %s191 = sshll.u32 [#allocation2], 4
          %s192 = int_to_ptr.vmem [resolvable:$true] %s191
          %194 = dma.hbm_to_vmem [thread:$0]  %s0, 768, %s192, [#allocation3]
        $region16: #{multi_label_classifier_forward.1} parent=11 // pred_fallthru
          _
      $region12: #{multi_label_classifier_forward.1} parent=5 // pred_fallthru
        _
      %p195 = scmp.lt.s32.totalorder %s18, 4
      // Predicated region
      $region17: #{multi_label_classifier_forward.1} parent=5 // pred_check
        %p196 = pneg %p195
      $region18: #{multi_label_classifier_forward.1} parent=5 // pred_check_branch
        %198 = sbr.rel (%p196) target = $region20
      $region19: #{multi_label_classifier_forward.1} parent=5 // pred_region
        // Predicated region
        $region21: #{multi_label_classifier_forward.1} parent=19 // pred_check
          %p199 = pneg %p59
        $region22: #{multi_label_classifier_forward.1} parent=19 // pred_check_branch
          %201 = sbr.rel (%p199) target = $region24
        $region23: #{multi_label_classifier_forward.1} parent=19 // pred_region
          %s202 = sand.u32 %s18, 1
          %s203 = scalar_lea.sflag [#allocation5], %s202
          %s204 = sand.u32 %s49, 1
          %s205 = smul.addr %s204, 768
          %s206 = scalar_lea.vmem [#allocation4], %s205
          %s208 = ssub.s32 12288, 12288
          %209 = vsyncadd %s203, %s208
          %s210 = smul.addr %s18, 192
          %s211 = smul.addr %s210, 64
          %s212 = scalar_lea.hbm %s1, %s211
          %s213 = sshll.u32 %s206, 4
          %s214 = int_to_ptr.vmem [resolvable:$true] %s213
          %219 = dma.hbm_to_vmem [thread:$0]  %s212, 12288, %s214, %s203, 128, 128, 8
        $region24: #{multi_label_classifier_forward.1} parent=19 // pred_fallthru
          _
        // Predicated region
        $region25: #{multi_label_classifier_forward.1} parent=19 // pred_check
          %p220 = pneg %p85
        $region26: #{multi_label_classifier_forward.1} parent=19 // pred_check_branch
          %222 = sbr.rel (%p220) target = $region28
        $region27: #{multi_label_classifier_forward.1} parent=19 // pred_region
          %s223 = sand.u32 %s18, 1
          %s224 = scalar_lea.sflag [#allocation5], %s223
          %s225 = sand.u32 %s75, 1
          %s226 = smul.addr %s225, 2
          %s227 = scalar_lea.vmem [#allocation6], %s226
          %s229 = ssub.s32 32, 32
          %230 = vsyncadd %s224, %s229
          %s231 = smul.addr %s18, 2
          %s232 = smul.addr %s231, 16
          %s233 = scalar_lea.hbm %s2, %s232
          %s235 = sshll.u32 %s227, 4
          %s236 = int_to_ptr.vmem [resolvable:$true] %s235
          %238 = dma.hbm_to_vmem [thread:$0]  %s233, 32, %s236, %s224
        $region28: #{multi_label_classifier_forward.1} parent=19 // pred_fallthru
          _
        // Predicated region
        $region29: #{multi_label_classifier_forward.1} parent=19 // pred_check
          %p239 = pneg %p111
        $region30: #{multi_label_classifier_forward.1} parent=19 // pred_check_branch
          %241 = sbr.rel (%p239) target = $region32
        $region31: #{multi_label_classifier_forward.1} parent=19 // pred_region
          %s242 = sand.u32 %s18, 1
          %s243 = scalar_lea.sflag [#allocation8], %s242
          %s244 = sand.u32 %s101, 1
          %s245 = smul.addr %s244, 128
          %s246 = scalar_lea.vmem [#allocation7], %s245
          %s248 = ssub.s32 2048, 2048
          %249 = vsyncadd %s243, %s248
          %s250 = smul.addr %s18, 32
          %s251 = smul.addr %s250, 64
          %s252 = scalar_lea.hbm %s3, %s251
          %s253 = sshll.u32 %s246, 4
          %s254 = int_to_ptr.vmem [resolvable:$true] %s253
          %259 = dma.hbm_to_vmem [thread:$0]  %s252, 2048, %s254, %s243, 64, 64, 4
        $region32: #{multi_label_classifier_forward.1} parent=19 // pred_fallthru
          _
        // Predicated region
        $region33: #{multi_label_classifier_forward.1} parent=19 // pred_check
          %p260 = pneg %p137
        $region34: #{multi_label_classifier_forward.1} parent=19 // pred_check_branch
          %262 = sbr.rel (%p260) target = $region36
        $region35: #{multi_label_classifier_forward.1} parent=19 // pred_region
          %s263 = sand.u32 %s18, 1
          %s264 = scalar_lea.sflag [#allocation8], %s263
          %s265 = sand.u32 %s127, 1
          %s266 = scalar_lea.vmem [#allocation9], %s265
          %s268 = ssub.s32 16, 16
          %269 = vsyncadd %s264, %s268
          %s270 = smul.addr %s18, 16
          %s271 = scalar_lea.hbm %s4, %s270
          %s273 = sshll.u32 %s266, 4
          %s274 = int_to_ptr.vmem [resolvable:$true] %s273
          %276 = dma.hbm_to_vmem [thread:$0]  %s271, 16, %s274, %s264
        $region36: #{multi_label_classifier_forward.1} parent=19 // pred_fallthru
          _
      $region20: #{multi_label_classifier_forward.1} parent=5 // pred_fallthru
        _
      %p277 = scmp.le.s32.totalorder 1, %s18
      %p278 = scmp.lt.s32.totalorder %s18, 5
      %p279 = pnand %p277, %p278
      %p280 = pneg %p279
      // Predicated region
      $region37: #{multi_label_classifier_forward.1} parent=5 // pred_check
        _
      $region38: #{multi_label_classifier_forward.1} parent=5 // pred_check_branch
        %282 = sbr.rel (%p279) target = $region40
      $region39: #{multi_label_classifier_forward.1} parent=5 // pred_region
        %s283 = ssub.s32 %s18, 1
        // Predicated region
        $region41: #{multi_label_classifier_forward.1} parent=39 // pred_check
          %p284 = pneg %p39
        $region42: #{multi_label_classifier_forward.1} parent=39 // pred_check_branch
          %286 = sbr.rel (%p284) target = $region44
        $region43: #{multi_label_classifier_forward.1} parent=39 // pred_region
          %287 = dma.done [#allocation3], 768
        $region44: #{multi_label_classifier_forward.1} parent=39 // pred_fallthru
          _
        %s288 = sand.u32 %s23, 1
        %s289 = scalar_lea.sflag [#allocation5], %s288
        %s290 = sand.u32 %s52, 1
        %s291 = smul.addr %s290, 768
        %s292 = scalar_lea.vmem [#allocation4], %s291
        // Predicated region
        $region45: #{multi_label_classifier_forward.1} parent=39 // pred_check
          %p293 = pneg %p65
        $region46: #{multi_label_classifier_forward.1} parent=39 // pred_check_branch
          %295 = sbr.rel (%p293) target = $region48
        $region47: #{multi_label_classifier_forward.1} parent=39 // pred_region
          %296 = dma.done %s289, 12288
        $region48: #{multi_label_classifier_forward.1} parent=39 // pred_fallthru
          _
        %s297 = sand.u32 %s23, 1
        %s298 = scalar_lea.sflag [#allocation5], %s297
        %s299 = sand.u32 %s78, 1
        %s300 = smul.addr %s299, 2
        %s301 = scalar_lea.vmem [#allocation6], %s300
        // Predicated region
        $region49: #{multi_label_classifier_forward.1} parent=39 // pred_check
          %p302 = pneg %p91
        $region50: #{multi_label_classifier_forward.1} parent=39 // pred_check_branch
          %304 = sbr.rel (%p302) target = $region52
        $region51: #{multi_label_classifier_forward.1} parent=39 // pred_region
          %305 = dma.done %s298, 32
        $region52: #{multi_label_classifier_forward.1} parent=39 // pred_fallthru
          _
        %s306 = sand.u32 %s23, 1
        %s307 = scalar_lea.sflag [#allocation8], %s306
        %s308 = sand.u32 %s104, 1
        %s309 = smul.addr %s308, 128
        %s310 = scalar_lea.vmem [#allocation7], %s309
        // Predicated region
        $region53: #{multi_label_classifier_forward.1} parent=39 // pred_check
          %p311 = pneg %p117
        $region54: #{multi_label_classifier_forward.1} parent=39 // pred_check_branch
          %313 = sbr.rel (%p311) target = $region56
        $region55: #{multi_label_classifier_forward.1} parent=39 // pred_region
          %314 = dma.done %s307, 2048
        $region56: #{multi_label_classifier_forward.1} parent=39 // pred_fallthru
          _
        %s315 = sand.u32 %s23, 1
        %s316 = scalar_lea.sflag [#allocation8], %s315
        %s317 = sand.u32 %s130, 1
        %s318 = scalar_lea.vmem [#allocation9], %s317
        // Predicated region
        $region57: #{multi_label_classifier_forward.1} parent=39 // pred_check
          %p319 = pneg %p143
        $region58: #{multi_label_classifier_forward.1} parent=39 // pred_check_branch
          %321 = sbr.rel (%p319) target = $region60
        $region59: #{multi_label_classifier_forward.1} parent=39 // pred_region
          %322 = dma.done %s316, 16
        $region60: #{multi_label_classifier_forward.1} parent=39 // pred_fallthru
          _
        %p323 = pneg %p39
        %p324 = pneg %p36
        %s325 = sand.u32 %s23, 1
        %s326 = scalar_lea.sflag [#allocation5], %s325
        %s327 = sand.u32 %s52, 1
        %s328 = smul.addr %s327, 768
        %s329 = scalar_lea.vmem [#allocation4], %s328
        %p330 = pneg %p65
        %p331 = pneg %p62
        %s332 = sand.u32 %s23, 1
        %s333 = scalar_lea.sflag [#allocation5], %s332
        %s334 = sand.u32 %s78, 1
        %s335 = smul.addr %s334, 2
        %s336 = scalar_lea.vmem [#allocation6], %s335
        %p337 = pneg %p91
        %p338 = pneg %p88
        %s339 = sand.u32 %s23, 1
        %s340 = scalar_lea.sflag [#allocation8], %s339
        %s341 = sand.u32 %s104, 1
        %s342 = smul.addr %s341, 128
        %s343 = scalar_lea.vmem [#allocation7], %s342
        %p344 = pneg %p117
        %p345 = pneg %p114
        %s346 = sand.u32 %s23, 1
        %s347 = scalar_lea.sflag [#allocation8], %s346
        %s348 = sand.u32 %s130, 1
        %s349 = scalar_lea.vmem [#allocation9], %s348
        %p350 = pneg %p143
        %p351 = pneg %p140
        %p352 = pneg %p169
        %p353 = pneg %p166
        %p354 = scmp.lt.s32.totalorder %s23, 3
        %s355 = scalar_select %p354, %s23, 3
        %s356 = smul.addr %s355, 8
        %s357 = scalar_lea.vmem %s5, %s356
        %p358 = scmp.lt.s32.totalorder %s23, 3
        %s359 = scalar_select %p358, %s23, 3
        %s360 = smul.addr %s359, 8
        %s361 = scalar_lea.vmem %s5, %s360
        %v363 = vld [vmem:[#allocation2] sm:$0xff]
        %v364 = vld [vmem:[#allocation2 + $0x8] sm:$0xff]
        %v365 = vld [vmem:[#allocation2 + $0x10] sm:$0xff]
        %v366 = vld [vmem:[#allocation2 + $0x18] sm:$0xff]
        %v367 = vld [vmem:[#allocation2 + $0x20] sm:$0xff]
        %v368 = vld [vmem:[#allocation2 + $0x28] sm:$0xff]
        %v369 = vpack.c.bf16 %v363, %v363
        %v370 = vpack.c.bf16 %v364, %v364
        %v371 = vpack.c.bf16 %v365, %v365
        %v372 = vpack.c.bf16 %v366, %v366
        %v373 = vpack.c.bf16 %v367, %v367
        %v374 = vpack.c.bf16 %v368, %v368
        %v375 = vld [vmem:[%s292] sm:$0xff]
        %v376 = vld [vmem:[%s292 + $0x8] sm:$0xff]
        %v377 = vld [vmem:[%s292 + $0x10] sm:$0xff]
        %v378 = vld [vmem:[%s292 + $0x18] sm:$0xff]
        %v379 = vld [vmem:[%s292 + $0x20] sm:$0xff]
        %v380 = vld [vmem:[%s292 + $0x28] sm:$0xff]
        %v381 = vld [vmem:[%s292 + $0x30] sm:$0xff]
        %v382 = vld [vmem:[%s292 + $0x38] sm:$0xff]
        %v383 = vld [vmem:[%s292 + $0x40] sm:$0xff]
        %v384 = vld [vmem:[%s292 + $0x48] sm:$0xff]
        %v385 = vld [vmem:[%s292 + $0x50] sm:$0xff]
        %v386 = vld [vmem:[%s292 + $0x58] sm:$0xff]
        %v387 = vld [vmem:[%s292 + $0x60] sm:$0xff]
        %v388 = vld [vmem:[%s292 + $0x68] sm:$0xff]
        %v389 = vld [vmem:[%s292 + $0x70] sm:$0xff]
        %v390 = vld [vmem:[%s292 + $0x78] sm:$0xff]
        %v391 = vld [vmem:[%s292 + $0x80] sm:$0xff]
        %v392 = vld [vmem:[%s292 + $0x88] sm:$0xff]
        %v393 = vld [vmem:[%s292 + $0x90] sm:$0xff]
        %v394 = vld [vmem:[%s292 + $0x98] sm:$0xff]
        %v395 = vld [vmem:[%s292 + $0xa0] sm:$0xff]
        %v396 = vld [vmem:[%s292 + $0xa8] sm:$0xff]
        %v397 = vld [vmem:[%s292 + $0xb0] sm:$0xff]
        %v398 = vld [vmem:[%s292 + $0xb8] sm:$0xff]
        %v399 = vld [vmem:[%s292 + $0xc0] sm:$0xff]
        %v400 = vld [vmem:[%s292 + $0xc8] sm:$0xff]
        %v401 = vld [vmem:[%s292 + $0xd0] sm:$0xff]
        %v402 = vld [vmem:[%s292 + $0xd8] sm:$0xff]
        %v403 = vld [vmem:[%s292 + $0xe0] sm:$0xff]
        %v404 = vld [vmem:[%s292 + $0xe8] sm:$0xff]
        %v405 = vld [vmem:[%s292 + $0xf0] sm:$0xff]
        %v406 = vld [vmem:[%s292 + $0xf8] sm:$0xff]
        %v407 = vld [vmem:[%s292 + $0x100] sm:$0xff]
        %v408 = vld [vmem:[%s292 + $0x108] sm:$0xff]
        %v409 = vld [vmem:[%s292 + $0x110] sm:$0xff]
        %v410 = vld [vmem:[%s292 + $0x118] sm:$0xff]
        %v411 = vld [vmem:[%s292 + $0x120] sm:$0xff]
        %v412 = vld [vmem:[%s292 + $0x128] sm:$0xff]
        %v413 = vld [vmem:[%s292 + $0x130] sm:$0xff]
        %v414 = vld [vmem:[%s292 + $0x138] sm:$0xff]
        %v415 = vld [vmem:[%s292 + $0x140] sm:$0xff]
        %v416 = vld [vmem:[%s292 + $0x148] sm:$0xff]
        %v417 = vld [vmem:[%s292 + $0x150] sm:$0xff]
        %v418 = vld [vmem:[%s292 + $0x158] sm:$0xff]
        %v419 = vld [vmem:[%s292 + $0x160] sm:$0xff]
        %v420 = vld [vmem:[%s292 + $0x168] sm:$0xff]
        %v421 = vld [vmem:[%s292 + $0x170] sm:$0xff]
        %v422 = vld [vmem:[%s292 + $0x178] sm:$0xff]
        %v423 = vld [vmem:[%s292 + $0x180] sm:$0xff]
        %v424 = vld [vmem:[%s292 + $0x188] sm:$0xff]
        %v425 = vld [vmem:[%s292 + $0x190] sm:$0xff]
        %v426 = vld [vmem:[%s292 + $0x198] sm:$0xff]
        %v427 = vld [vmem:[%s292 + $0x1a0] sm:$0xff]
        %v428 = vld [vmem:[%s292 + $0x1a8] sm:$0xff]
        %v429 = vld [vmem:[%s292 + $0x1b0] sm:$0xff]
        %v430 = vld [vmem:[%s292 + $0x1b8] sm:$0xff]
        %v431 = vld [vmem:[%s292 + $0x1c0] sm:$0xff]
        %v432 = vld [vmem:[%s292 + $0x1c8] sm:$0xff]
        %v433 = vld [vmem:[%s292 + $0x1d0] sm:$0xff]
        %v434 = vld [vmem:[%s292 + $0x1d8] sm:$0xff]
        %v435 = vld [vmem:[%s292 + $0x1e0] sm:$0xff]
        %v436 = vld [vmem:[%s292 + $0x1e8] sm:$0xff]
        %v437 = vld [vmem:[%s292 + $0x1f0] sm:$0xff]
        %v438 = vld [vmem:[%s292 + $0x1f8] sm:$0xff]
        %v439 = vld [vmem:[%s292 + $0x200] sm:$0xff]
        %v440 = vld [vmem:[%s292 + $0x208] sm:$0xff]
        %v441 = vld [vmem:[%s292 + $0x210] sm:$0xff]
        %v442 = vld [vmem:[%s292 + $0x218] sm:$0xff]
        %v443 = vld [vmem:[%s292 + $0x220] sm:$0xff]
        %v444 = vld [vmem:[%s292 + $0x228] sm:$0xff]
        %v445 = vld [vmem:[%s292 + $0x230] sm:$0xff]
        %v446 = vld [vmem:[%s292 + $0x238] sm:$0xff]
        %v447 = vld [vmem:[%s292 + $0x240] sm:$0xff]
        %v448 = vld [vmem:[%s292 + $0x248] sm:$0xff]
        %v449 = vld [vmem:[%s292 + $0x250] sm:$0xff]
        %v450 = vld [vmem:[%s292 + $0x258] sm:$0xff]
        %v451 = vld [vmem:[%s292 + $0x260] sm:$0xff]
        %v452 = vld [vmem:[%s292 + $0x268] sm:$0xff]
        %v453 = vld [vmem:[%s292 + $0x270] sm:$0xff]
        %v454 = vld [vmem:[%s292 + $0x278] sm:$0xff]
        %v455 = vld [vmem:[%s292 + $0x280] sm:$0xff]
        %v456 = vld [vmem:[%s292 + $0x288] sm:$0xff]
        %v457 = vld [vmem:[%s292 + $0x290] sm:$0xff]
        %v458 = vld [vmem:[%s292 + $0x298] sm:$0xff]
        %v459 = vld [vmem:[%s292 + $0x2a0] sm:$0xff]
        %v460 = vld [vmem:[%s292 + $0x2a8] sm:$0xff]
        %v461 = vld [vmem:[%s292 + $0x2b0] sm:$0xff]
        %v462 = vld [vmem:[%s292 + $0x2b8] sm:$0xff]
        %v463 = vld [vmem:[%s292 + $0x2c0] sm:$0xff]
        %v464 = vld [vmem:[%s292 + $0x2c8] sm:$0xff]
        %v465 = vld [vmem:[%s292 + $0x2d0] sm:$0xff]
        %v466 = vld [vmem:[%s292 + $0x2d8] sm:$0xff]
        %v467 = vld [vmem:[%s292 + $0x2e0] sm:$0xff]
        %v468 = vld [vmem:[%s292 + $0x2e8] sm:$0xff]
        %v469 = vld [vmem:[%s292 + $0x2f0] sm:$0xff]
        %v470 = vld [vmem:[%s292 + $0x2f8] sm:$0xff]
        %v471 = vld [vmem:[%s301] sm:$0x3]
        %v473 = vlaneseq
        %v474 = vshrl.u32 %v473, 7
        %v475 = vsub.s32 0, %v474
        %v476 = vrot.slane %v471, %v475
        %v477 = vlaneseq
        %v478 = vshrl.u32 %v477, 7
        %v479 = vsub.s32 1, %v478
        %v480 = vrot.slane %v471, %v479
        %v579 = vunpack.c.l.b16 %v375
        %v580 = vunpack.c.h.b16 %v375
        %v581 = vunpack.c.l.b16 %v376
        %v582 = vunpack.c.h.b16 %v376
        %v583 = vunpack.c.l.b16 %v377
        %v584 = vunpack.c.h.b16 %v377
        %v585 = vunpack.c.l.b16 %v378
        %v586 = vunpack.c.h.b16 %v378
        %v587 = vunpack.c.l.b16 %v379
        %v588 = vunpack.c.h.b16 %v379
        %v589 = vunpack.c.l.b16 %v380
        %v590 = vunpack.c.h.b16 %v380
        %v591 = vunpack.c.l.b16 %v381
        %v592 = vunpack.c.h.b16 %v381
        %v593 = vunpack.c.l.b16 %v382
        %v594 = vunpack.c.h.b16 %v382
        %v595 = vunpack.c.l.b16 %v383
        %v596 = vunpack.c.h.b16 %v383
        %v597 = vunpack.c.l.b16 %v384
        %v598 = vunpack.c.h.b16 %v384
        %v599 = vunpack.c.l.b16 %v385
        %v600 = vunpack.c.h.b16 %v385
        %v601 = vunpack.c.l.b16 %v386
        %v602 = vunpack.c.h.b16 %v386
        %v603 = vunpack.c.l.b16 %v387
        %v604 = vunpack.c.h.b16 %v387
        %v605 = vunpack.c.l.b16 %v388
        %v606 = vunpack.c.h.b16 %v388
        %v607 = vunpack.c.l.b16 %v389
        %v608 = vunpack.c.h.b16 %v389
        %v609 = vunpack.c.l.b16 %v390
        %v610 = vunpack.c.h.b16 %v390
        %v611 = vunpack.c.l.b16 %v391
        %v612 = vunpack.c.h.b16 %v391
        %v613 = vunpack.c.l.b16 %v392
        %v614 = vunpack.c.h.b16 %v392
        %v615 = vunpack.c.l.b16 %v393
        %v616 = vunpack.c.h.b16 %v393
        %v617 = vunpack.c.l.b16 %v394
        %v618 = vunpack.c.h.b16 %v394
        %v619 = vunpack.c.l.b16 %v395
        %v620 = vunpack.c.h.b16 %v395
        %v621 = vunpack.c.l.b16 %v396
        %v622 = vunpack.c.h.b16 %v396
        %v623 = vunpack.c.l.b16 %v397
        %v624 = vunpack.c.h.b16 %v397
        %v625 = vunpack.c.l.b16 %v398
        %v626 = vunpack.c.h.b16 %v398
        %v627 = vunpack.c.l.b16 %v399
        %v628 = vunpack.c.h.b16 %v399
        %v629 = vunpack.c.l.b16 %v400
        %v630 = vunpack.c.h.b16 %v400
        %v631 = vunpack.c.l.b16 %v401
        %v632 = vunpack.c.h.b16 %v401
        %v633 = vunpack.c.l.b16 %v402
        %v634 = vunpack.c.h.b16 %v402
        %v635 = vunpack.c.l.b16 %v403
        %v636 = vunpack.c.h.b16 %v403
        %v637 = vunpack.c.l.b16 %v404
        %v638 = vunpack.c.h.b16 %v404
        %v639 = vunpack.c.l.b16 %v405
        %v640 = vunpack.c.h.b16 %v405
        %v641 = vunpack.c.l.b16 %v406
        %v642 = vunpack.c.h.b16 %v406
        %v643 = vunpack.c.l.b16 %v407
        %v644 = vunpack.c.h.b16 %v407
        %v645 = vunpack.c.l.b16 %v408
        %v646 = vunpack.c.h.b16 %v408
        %v647 = vunpack.c.l.b16 %v409
        %v648 = vunpack.c.h.b16 %v409
        %v649 = vunpack.c.l.b16 %v410
        %v650 = vunpack.c.h.b16 %v410
        %v651 = vunpack.c.l.b16 %v411
        %v652 = vunpack.c.h.b16 %v411
        %v653 = vunpack.c.l.b16 %v412
        %v654 = vunpack.c.h.b16 %v412
        %v655 = vunpack.c.l.b16 %v413
        %v656 = vunpack.c.h.b16 %v413
        %v657 = vunpack.c.l.b16 %v414
        %v658 = vunpack.c.h.b16 %v414
        %v659 = vunpack.c.l.b16 %v415
        %v660 = vunpack.c.h.b16 %v415
        %v661 = vunpack.c.l.b16 %v416
        %v662 = vunpack.c.h.b16 %v416
        %v663 = vunpack.c.l.b16 %v417
        %v664 = vunpack.c.h.b16 %v417
        %v665 = vunpack.c.l.b16 %v418
        %v666 = vunpack.c.h.b16 %v418
        %v667 = vunpack.c.l.b16 %v419
        %v668 = vunpack.c.h.b16 %v419
        %v669 = vunpack.c.l.b16 %v420
        %v670 = vunpack.c.h.b16 %v420
        %v671 = vunpack.c.l.b16 %v421
        %v672 = vunpack.c.h.b16 %v421
        %v673 = vunpack.c.l.b16 %v422
        %v674 = vunpack.c.h.b16 %v422
        %v675 = vunpack.c.l.b16 %v423
        %v676 = vunpack.c.h.b16 %v423
        %v677 = vunpack.c.l.b16 %v424
        %v678 = vunpack.c.h.b16 %v424
        %v679 = vunpack.c.l.b16 %v425
        %v680 = vunpack.c.h.b16 %v425
        %v681 = vunpack.c.l.b16 %v426
        %v682 = vunpack.c.h.b16 %v426
        %v683 = vunpack.c.l.b16 %v427
        %v684 = vunpack.c.h.b16 %v427
        %v685 = vunpack.c.l.b16 %v428
        %v686 = vunpack.c.h.b16 %v428
        %v687 = vunpack.c.l.b16 %v429
        %v688 = vunpack.c.h.b16 %v429
        %v689 = vunpack.c.l.b16 %v430
        %v690 = vunpack.c.h.b16 %v430
        %v691 = vunpack.c.l.b16 %v431
        %v692 = vunpack.c.h.b16 %v431
        %v693 = vunpack.c.l.b16 %v432
        %v694 = vunpack.c.h.b16 %v432
        %v695 = vunpack.c.l.b16 %v433
        %v696 = vunpack.c.h.b16 %v433
        %v697 = vunpack.c.l.b16 %v434
        %v698 = vunpack.c.h.b16 %v434
        %v699 = vunpack.c.l.b16 %v435
        %v700 = vunpack.c.h.b16 %v435
        %v701 = vunpack.c.l.b16 %v436
        %v702 = vunpack.c.h.b16 %v436
        %v703 = vunpack.c.l.b16 %v437
        %v704 = vunpack.c.h.b16 %v437
        %v705 = vunpack.c.l.b16 %v438
        %v706 = vunpack.c.h.b16 %v438
        %v707 = vunpack.c.l.b16 %v439
        %v708 = vunpack.c.h.b16 %v439
        %v709 = vunpack.c.l.b16 %v440
        %v710 = vunpack.c.h.b16 %v440
        %v711 = vunpack.c.l.b16 %v441
        %v712 = vunpack.c.h.b16 %v441
        %v713 = vunpack.c.l.b16 %v442
        %v714 = vunpack.c.h.b16 %v442
        %v715 = vunpack.c.l.b16 %v443
        %v716 = vunpack.c.h.b16 %v443
        %v717 = vunpack.c.l.b16 %v444
        %v718 = vunpack.c.h.b16 %v444
        %v719 = vunpack.c.l.b16 %v445
        %v720 = vunpack.c.h.b16 %v445
        %v721 = vunpack.c.l.b16 %v446
        %v722 = vunpack.c.h.b16 %v446
        %v723 = vunpack.c.l.b16 %v447
        %v724 = vunpack.c.h.b16 %v447
        %v725 = vunpack.c.l.b16 %v448
        %v726 = vunpack.c.h.b16 %v448
        %v727 = vunpack.c.l.b16 %v449
        %v728 = vunpack.c.h.b16 %v449
        %v729 = vunpack.c.l.b16 %v450
        %v730 = vunpack.c.h.b16 %v450
        %v731 = vunpack.c.l.b16 %v451
        %v732 = vunpack.c.h.b16 %v451
        %v733 = vunpack.c.l.b16 %v452
        %v734 = vunpack.c.h.b16 %v452
        %v735 = vunpack.c.l.b16 %v453
        %v736 = vunpack.c.h.b16 %v453
        %v737 = vunpack.c.l.b16 %v454
        %v738 = vunpack.c.h.b16 %v454
        %v739 = vunpack.c.l.b16 %v455
        %v740 = vunpack.c.h.b16 %v455
        %v741 = vunpack.c.l.b16 %v456
        %v742 = vunpack.c.h.b16 %v456
        %v743 = vunpack.c.l.b16 %v457
        %v744 = vunpack.c.h.b16 %v457
        %v745 = vunpack.c.l.b16 %v458
        %v746 = vunpack.c.h.b16 %v458
        %v747 = vunpack.c.l.b16 %v459
        %v748 = vunpack.c.h.b16 %v459
        %v749 = vunpack.c.l.b16 %v460
        %v750 = vunpack.c.h.b16 %v460
        %v751 = vunpack.c.l.b16 %v461
        %v752 = vunpack.c.h.b16 %v461
        %v753 = vunpack.c.l.b16 %v462
        %v754 = vunpack.c.h.b16 %v462
        %v755 = vunpack.c.l.b16 %v463
        %v756 = vunpack.c.h.b16 %v463
        %v757 = vunpack.c.l.b16 %v464
        %v758 = vunpack.c.h.b16 %v464
        %v759 = vunpack.c.l.b16 %v465
        %v760 = vunpack.c.h.b16 %v465
        %v761 = vunpack.c.l.b16 %v466
        %v762 = vunpack.c.h.b16 %v466
        %v763 = vunpack.c.l.b16 %v467
        %v764 = vunpack.c.h.b16 %v467
        %v765 = vunpack.c.l.b16 %v468
        %v766 = vunpack.c.h.b16 %v468
        %v767 = vunpack.c.l.b16 %v469
        %v768 = vunpack.c.h.b16 %v469
        %v769 = vunpack.c.l.b16 %v470
        %v770 = vunpack.c.h.b16 %v470
        %v771 = vpack.c.b16 %v581, %v579
        %v772 = vpack.c.b16 %v582, %v580
        %v773 = vpack.c.b16 %v585, %v583
        %v774 = vpack.c.b16 %v586, %v584
        %v775 = vpack.c.b16 %v589, %v587
        %v776 = vpack.c.b16 %v590, %v588
        %v777 = vpack.c.b16 %v593, %v591
        %v778 = vpack.c.b16 %v594, %v592
        %v779 = vpack.c.b16 %v597, %v595
        %v780 = vpack.c.b16 %v598, %v596
        %v781 = vpack.c.b16 %v601, %v599
        %v782 = vpack.c.b16 %v602, %v600
        %v783 = vpack.c.b16 %v605, %v603
        %v784 = vpack.c.b16 %v606, %v604
        %v785 = vpack.c.b16 %v609, %v607
        %v786 = vpack.c.b16 %v610, %v608
        %v787 = vpack.c.b16 %v613, %v611
        %v788 = vpack.c.b16 %v614, %v612
        %v789 = vpack.c.b16 %v617, %v615
        %v790 = vpack.c.b16 %v618, %v616
        %v791 = vpack.c.b16 %v621, %v619
        %v792 = vpack.c.b16 %v622, %v620
        %v793 = vpack.c.b16 %v625, %v623
        %v794 = vpack.c.b16 %v626, %v624
        %v795 = vpack.c.b16 %v629, %v627
        %v796 = vpack.c.b16 %v630, %v628
        %v797 = vpack.c.b16 %v633, %v631
        %v798 = vpack.c.b16 %v634, %v632
        %v799 = vpack.c.b16 %v637, %v635
        %v800 = vpack.c.b16 %v638, %v636
        %v801 = vpack.c.b16 %v641, %v639
        %v802 = vpack.c.b16 %v642, %v640
        %v803 = vpack.c.b16 %v645, %v643
        %v804 = vpack.c.b16 %v646, %v644
        %v805 = vpack.c.b16 %v649, %v647
        %v806 = vpack.c.b16 %v650, %v648
        %v807 = vpack.c.b16 %v653, %v651
        %v808 = vpack.c.b16 %v654, %v652
        %v809 = vpack.c.b16 %v657, %v655
        %v810 = vpack.c.b16 %v658, %v656
        %v811 = vpack.c.b16 %v661, %v659
        %v812 = vpack.c.b16 %v662, %v660
        %v813 = vpack.c.b16 %v665, %v663
        %v814 = vpack.c.b16 %v666, %v664
        %v815 = vpack.c.b16 %v669, %v667
        %v816 = vpack.c.b16 %v670, %v668
        %v817 = vpack.c.b16 %v673, %v671
        %v818 = vpack.c.b16 %v674, %v672
        %v819 = vpack.c.b16 %v677, %v675
        %v820 = vpack.c.b16 %v678, %v676
        %v821 = vpack.c.b16 %v681, %v679
        %v822 = vpack.c.b16 %v682, %v680
        %v823 = vpack.c.b16 %v685, %v683
        %v824 = vpack.c.b16 %v686, %v684
        %v825 = vpack.c.b16 %v689, %v687
        %v826 = vpack.c.b16 %v690, %v688
        %v827 = vpack.c.b16 %v693, %v691
        %v828 = vpack.c.b16 %v694, %v692
        %v829 = vpack.c.b16 %v697, %v695
        %v830 = vpack.c.b16 %v698, %v696
        %v831 = vpack.c.b16 %v701, %v699
        %v832 = vpack.c.b16 %v702, %v700
        %v833 = vpack.c.b16 %v705, %v703
        %v834 = vpack.c.b16 %v706, %v704
        %v835 = vpack.c.b16 %v709, %v707
        %v836 = vpack.c.b16 %v710, %v708
        %v837 = vpack.c.b16 %v713, %v711
        %v838 = vpack.c.b16 %v714, %v712
        %v839 = vpack.c.b16 %v717, %v715
        %v840 = vpack.c.b16 %v718, %v716
        %v841 = vpack.c.b16 %v721, %v719
        %v842 = vpack.c.b16 %v722, %v720
        %v843 = vpack.c.b16 %v725, %v723
        %v844 = vpack.c.b16 %v726, %v724
        %v845 = vpack.c.b16 %v729, %v727
        %v846 = vpack.c.b16 %v730, %v728
        %v847 = vpack.c.b16 %v733, %v731
        %v848 = vpack.c.b16 %v734, %v732
        %v849 = vpack.c.b16 %v737, %v735
        %v850 = vpack.c.b16 %v738, %v736
        %v851 = vpack.c.b16 %v741, %v739
        %v852 = vpack.c.b16 %v742, %v740
        %v853 = vpack.c.b16 %v745, %v743
        %v854 = vpack.c.b16 %v746, %v744
        %v855 = vpack.c.b16 %v749, %v747
        %v856 = vpack.c.b16 %v750, %v748
        %v857 = vpack.c.b16 %v753, %v751
        %v858 = vpack.c.b16 %v754, %v752
        %v859 = vpack.c.b16 %v757, %v755
        %v860 = vpack.c.b16 %v758, %v756
        %v861 = vpack.c.b16 %v761, %v759
        %v862 = vpack.c.b16 %v762, %v760
        %v863 = vpack.c.b16 %v765, %v763
        %v864 = vpack.c.b16 %v766, %v764
        %v865 = vpack.c.b16 %v769, %v767
        %v866 = vpack.c.b16 %v770, %v768
        %963 = vmatprep.subr.bf16.mxu0 %v786
        %964 = vmatpush1.bf16.msra.mxu0 %v785
        %965 = vmatprep.subr.bf16.mxu0 %v784
        %966 = vmatpush1.bf16.msra.mxu0 %v783
        %967 = vmatprep.subr.bf16.mxu0 %v782
        %968 = vmatpush1.bf16.msra.mxu0 %v781
        %969 = vmatprep.subr.bf16.mxu0 %v780
        %970 = vmatpush1.bf16.msra.mxu0 %v779
        %971 = vmatprep.subr.bf16.mxu0 %v778
        %972 = vmatpush1.bf16.msra.mxu0 %v777
        %973 = vmatprep.subr.bf16.mxu0 %v776
        %974 = vmatpush1.bf16.msra.mxu0 %v775
        %975 = vmatprep.subr.bf16.mxu0 %v774
        %976 = vmatpush1.bf16.msra.mxu0 %v773
        %977 = vmatprep.subr.bf16.mxu0 %v772
        %978 = vmatpush1.bf16.msra.mxu0 %v771
        %979 = vmatprep.subr.bf16.mxu0 %v802
        %980 = vmatpush2.bf16.msra.mxu0 %v801
        %981 = vmatprep.subr.bf16.mxu0 %v800
        %982 = vmatpush2.bf16.msra.mxu0 %v799
        %983 = vmatprep.subr.bf16.mxu0 %v798
        %984 = vmatpush2.bf16.msra.mxu0 %v797
        %985 = vmatprep.subr.bf16.mxu0 %v796
        %986 = vmatpush2.bf16.msra.mxu0 %v795
        %987 = vmatprep.subr.bf16.mxu0 %v794
        %988 = vmatpush2.bf16.msra.mxu0 %v793
        %989 = vmatprep.subr.bf16.mxu0 %v792
        %990 = vmatpush2.bf16.msra.mxu0 %v791
        %991 = vmatprep.subr.bf16.mxu0 %v790
        %992 = vmatpush2.bf16.msra.mxu0 %v789
        %993 = vmatprep.subr.bf16.mxu0 %v788
        %994 = vmatpush2.bf16.msra.mxu0 %v787
        %995 = vmatprep.mubr.bf16.mxu0 %v370
        %996 = vmatmul.mubr.bf16.gmra.mxu0 %v369
        %v997 = vpop.f32.mrf.mxu0
        %v998 = vadd.f32 %v476, %v997
        %v999 = vpop.f32.mrf.mxu0
        %v1000 = vadd.f32 %v480, %v999
        %v1001 = vpop.f32.mrf.mxu0
        %v1002 = vpop.f32.mrf.mxu0
        %1003 = vdwg.mxu0
        %1004 = vmatprep.subr.bf16.mxu0 %v818
        %1005 = vmatpush1.bf16.msra.mxu0 %v817
        %1006 = vmatprep.subr.bf16.mxu0 %v816
        %1007 = vmatpush1.bf16.msra.mxu0 %v815
        %1008 = vmatprep.subr.bf16.mxu0 %v814
        %1009 = vmatpush1.bf16.msra.mxu0 %v813
        %1010 = vmatprep.subr.bf16.mxu0 %v812
        %1011 = vmatpush1.bf16.msra.mxu0 %v811
        %1012 = vmatprep.subr.bf16.mxu0 %v810
        %1013 = vmatpush1.bf16.msra.mxu0 %v809
        %1014 = vmatprep.subr.bf16.mxu0 %v808
        %1015 = vmatpush1.bf16.msra.mxu0 %v807
        %1016 = vmatprep.subr.bf16.mxu0 %v806
        %1017 = vmatpush1.bf16.msra.mxu0 %v805
        %1018 = vmatprep.subr.bf16.mxu0 %v804
        %1019 = vmatpush1.bf16.msra.mxu0 %v803
        %1020 = vmatprep.subr.bf16.mxu0 %v834
        %1021 = vmatpush2.bf16.msra.mxu0 %v833
        %1022 = vmatprep.subr.bf16.mxu0 %v832
        %1023 = vmatpush2.bf16.msra.mxu0 %v831
        %1024 = vmatprep.subr.bf16.mxu0 %v830
        %1025 = vmatpush2.bf16.msra.mxu0 %v829
        %1026 = vmatprep.subr.bf16.mxu0 %v828
        %1027 = vmatpush2.bf16.msra.mxu0 %v827
        %1028 = vmatprep.subr.bf16.mxu0 %v826
        %1029 = vmatpush2.bf16.msra.mxu0 %v825
        %1030 = vmatprep.subr.bf16.mxu0 %v824
        %1031 = vmatpush2.bf16.msra.mxu0 %v823
        %1032 = vmatprep.subr.bf16.mxu0 %v822
        %1033 = vmatpush2.bf16.msra.mxu0 %v821
        %1034 = vmatprep.subr.bf16.mxu0 %v820
        %1035 = vmatpush2.bf16.msra.mxu0 %v819
        %1036 = vmatprep.mubr.bf16.mxu0 %v372
        %1037 = vmatmul.mubr.bf16.gmra.mxu0 %v371
        %v1038 = vpop.f32.mrf.mxu0
        %v1039 = vadd.f32 %v998, %v1038
        %v1040 = vpop.f32.mrf.mxu0
        %v1041 = vadd.f32 %v1000, %v1040
        %v1042 = vpop.f32.mrf.mxu0
        %v1043 = vpop.f32.mrf.mxu0
        %1044 = vdwg.mxu0
        %1045 = vmatprep.subr.bf16.mxu0 %v850
        %1046 = vmatpush1.bf16.msra.mxu0 %v849
        %1047 = vmatprep.subr.bf16.mxu0 %v848
        %1048 = vmatpush1.bf16.msra.mxu0 %v847
        %1049 = vmatprep.subr.bf16.mxu0 %v846
        %1050 = vmatpush1.bf16.msra.mxu0 %v845
        %1051 = vmatprep.subr.bf16.mxu0 %v844
        %1052 = vmatpush1.bf16.msra.mxu0 %v843
        %1053 = vmatprep.subr.bf16.mxu0 %v842
        %1054 = vmatpush1.bf16.msra.mxu0 %v841
        %1055 = vmatprep.subr.bf16.mxu0 %v840
        %1056 = vmatpush1.bf16.msra.mxu0 %v839
        %1057 = vmatprep.subr.bf16.mxu0 %v838
        %1058 = vmatpush1.bf16.msra.mxu0 %v837
        %1059 = vmatprep.subr.bf16.mxu0 %v836
        %1060 = vmatpush1.bf16.msra.mxu0 %v835
        %1061 = vmatprep.subr.bf16.mxu0 %v866
        %1062 = vmatpush2.bf16.msra.mxu0 %v865
        %1063 = vmatprep.subr.bf16.mxu0 %v864
        %1064 = vmatpush2.bf16.msra.mxu0 %v863
        %1065 = vmatprep.subr.bf16.mxu0 %v862
        %1066 = vmatpush2.bf16.msra.mxu0 %v861
        %1067 = vmatprep.subr.bf16.mxu0 %v860
        %1068 = vmatpush2.bf16.msra.mxu0 %v859
        %1069 = vmatprep.subr.bf16.mxu0 %v858
        %1070 = vmatpush2.bf16.msra.mxu0 %v857
        %1071 = vmatprep.subr.bf16.mxu0 %v856
        %1072 = vmatpush2.bf16.msra.mxu0 %v855
        %1073 = vmatprep.subr.bf16.mxu0 %v854
        %1074 = vmatpush2.bf16.msra.mxu0 %v853
        %1075 = vmatprep.subr.bf16.mxu0 %v852
        %1076 = vmatpush2.bf16.msra.mxu0 %v851
        %1077 = vmatprep.mubr.bf16.mxu0 %v374
        %1078 = vmatmul.mubr.bf16.gmra.mxu0 %v373
        %v1079 = vpop.f32.mrf.mxu0
        %v1080 = vadd.f32 %v1039, %v1079
        %v1081 = vpop.f32.mrf.mxu0
        %v1082 = vadd.f32 %v1041, %v1081
        %v1083 = vpop.f32.mrf.mxu0
        %v1084 = vpop.f32.mrf.mxu0
        %1085 = vdwg.mxu0
        %v1086 = vmax.f32 %v1080, 0.0
        %v1087 = vmax.f32 %v1082, 0.0
        %v1088 = vpack.c.bf16 %v1086, %v1086
        %v1089 = vpack.c.bf16 %v1087, %v1087
        %v1090 = vld [vmem:[%s310] sm:$0xf]
        %v1091 = vld [vmem:[%s310 + $0x4] sm:$0xf]
        %v1092 = vld [vmem:[%s310 + $0x8] sm:$0xf]
        %v1093 = vld [vmem:[%s310 + $0xc] sm:$0xf]
        %v1094 = vld [vmem:[%s310 + $0x10] sm:$0xf]
        %v1095 = vld [vmem:[%s310 + $0x14] sm:$0xf]
        %v1096 = vld [vmem:[%s310 + $0x18] sm:$0xf]
        %v1097 = vld [vmem:[%s310 + $0x1c] sm:$0xf]
        %v1098 = vld [vmem:[%s310 + $0x20] sm:$0xf]
        %v1099 = vld [vmem:[%s310 + $0x24] sm:$0xf]
        %v1100 = vld [vmem:[%s310 + $0x28] sm:$0xf]
        %v1101 = vld [vmem:[%s310 + $0x2c] sm:$0xf]
        %v1102 = vld [vmem:[%s310 + $0x30] sm:$0xf]
        %v1103 = vld [vmem:[%s310 + $0x34] sm:$0xf]
        %v1104 = vld [vmem:[%s310 + $0x38] sm:$0xf]
        %v1105 = vld [vmem:[%s310 + $0x3c] sm:$0xf]
        %v1106 = vld [vmem:[%s310 + $0x40] sm:$0xf]
        %v1107 = vld [vmem:[%s310 + $0x44] sm:$0xf]
        %v1108 = vld [vmem:[%s310 + $0x48] sm:$0xf]
        %v1109 = vld [vmem:[%s310 + $0x4c] sm:$0xf]
        %v1110 = vld [vmem:[%s310 + $0x50] sm:$0xf]
        %v1111 = vld [vmem:[%s310 + $0x54] sm:$0xf]
        %v1112 = vld [vmem:[%s310 + $0x58] sm:$0xf]
        %v1113 = vld [vmem:[%s310 + $0x5c] sm:$0xf]
        %v1114 = vld [vmem:[%s310 + $0x60] sm:$0xf]
        %v1115 = vld [vmem:[%s310 + $0x64] sm:$0xf]
        %v1116 = vld [vmem:[%s310 + $0x68] sm:$0xf]
        %v1117 = vld [vmem:[%s310 + $0x6c] sm:$0xf]
        %v1118 = vld [vmem:[%s310 + $0x70] sm:$0xf]
        %v1119 = vld [vmem:[%s310 + $0x74] sm:$0xf]
        %v1120 = vld [vmem:[%s310 + $0x78] sm:$0xf]
        %v1121 = vld [vmem:[%s310 + $0x7c] sm:$0xf]
        %v1122 = vld [vmem:[%s318] sm:$0x1]
        %v1124 = vlaneseq
        %v1125 = vshrl.u32 %v1124, 7
        %v1126 = vsub.s32 0, %v1125
        %v1127 = vrot.slane %v1122, %v1126
        %v1161 = vunpack.c.l.b16 %v1090
        %v1162 = vunpack.c.l.b16 %v1091
        %v1163 = vunpack.c.l.b16 %v1092
        %v1164 = vunpack.c.l.b16 %v1093
        %v1165 = vunpack.c.l.b16 %v1094
        %v1166 = vunpack.c.l.b16 %v1095
        %v1167 = vunpack.c.l.b16 %v1096
        %v1168 = vunpack.c.l.b16 %v1097
        %v1169 = vunpack.c.l.b16 %v1098
        %v1170 = vunpack.c.l.b16 %v1099
        %v1171 = vunpack.c.l.b16 %v1100
        %v1172 = vunpack.c.l.b16 %v1101
        %v1173 = vunpack.c.l.b16 %v1102
        %v1174 = vunpack.c.l.b16 %v1103
        %v1175 = vunpack.c.l.b16 %v1104
        %v1176 = vunpack.c.l.b16 %v1105
        %v1177 = vunpack.c.l.b16 %v1106
        %v1178 = vunpack.c.l.b16 %v1107
        %v1179 = vunpack.c.l.b16 %v1108
        %v1180 = vunpack.c.l.b16 %v1109
        %v1181 = vunpack.c.l.b16 %v1110
        %v1182 = vunpack.c.l.b16 %v1111
        %v1183 = vunpack.c.l.b16 %v1112
        %v1184 = vunpack.c.l.b16 %v1113
        %v1185 = vunpack.c.l.b16 %v1114
        %v1186 = vunpack.c.l.b16 %v1115
        %v1187 = vunpack.c.l.b16 %v1116
        %v1188 = vunpack.c.l.b16 %v1117
        %v1189 = vunpack.c.l.b16 %v1118
        %v1190 = vunpack.c.l.b16 %v1119
        %v1191 = vunpack.c.l.b16 %v1120
        %v1192 = vunpack.c.l.b16 %v1121
        %v1193 = vpack.c.b16 %v1162, %v1161
        %v1194 = vpack.c.b16 %v1164, %v1163
        %v1195 = vpack.c.b16 %v1166, %v1165
        %v1196 = vpack.c.b16 %v1168, %v1167
        %v1197 = vpack.c.b16 %v1170, %v1169
        %v1198 = vpack.c.b16 %v1172, %v1171
        %v1199 = vpack.c.b16 %v1174, %v1173
        %v1200 = vpack.c.b16 %v1176, %v1175
        %v1201 = vpack.c.b16 %v1178, %v1177
        %v1202 = vpack.c.b16 %v1180, %v1179
        %v1203 = vpack.c.b16 %v1182, %v1181
        %v1204 = vpack.c.b16 %v1184, %v1183
        %v1205 = vpack.c.b16 %v1186, %v1185
        %v1206 = vpack.c.b16 %v1188, %v1187
        %v1207 = vpack.c.b16 %v1190, %v1189
        %v1208 = vpack.c.b16 %v1192, %v1191
        %1225 = vmatprep.subr.bf16.mxu0 0
        %1226 = vmatpush1.bf16.msra.mxu0 %v1200
        %1227 = vmatprep.subr.bf16.mxu0 0
        %1228 = vmatpush1.bf16.msra.mxu0 %v1199
        %1229 = vmatprep.subr.bf16.mxu0 0
        %1230 = vmatpush1.bf16.msra.mxu0 %v1198
        %1231 = vmatprep.subr.bf16.mxu0 0
        %1232 = vmatpush1.bf16.msra.mxu0 %v1197
        %1233 = vmatprep.subr.bf16.mxu0 0
        %1234 = vmatpush1.bf16.msra.mxu0 %v1196
        %1235 = vmatprep.subr.bf16.mxu0 0
        %1236 = vmatpush1.bf16.msra.mxu0 %v1195
        %1237 = vmatprep.subr.bf16.mxu0 0
        %1238 = vmatpush1.bf16.msra.mxu0 %v1194
        %1239 = vmatprep.subr.bf16.mxu0 0
        %1240 = vmatpush1.bf16.msra.mxu0 %v1193
        %1241 = vmatprep.subr.bf16.mxu0 0
        %1242 = vmatpush2.bf16.msra.mxu0 %v1208
        %1243 = vmatprep.subr.bf16.mxu0 0
        %1244 = vmatpush2.bf16.msra.mxu0 %v1207
        %1245 = vmatprep.subr.bf16.mxu0 0
        %1246 = vmatpush2.bf16.msra.mxu0 %v1206
        %1247 = vmatprep.subr.bf16.mxu0 0
        %1248 = vmatpush2.bf16.msra.mxu0 %v1205
        %1249 = vmatprep.subr.bf16.mxu0 0
        %1250 = vmatpush2.bf16.msra.mxu0 %v1204
        %1251 = vmatprep.subr.bf16.mxu0 0
        %1252 = vmatpush2.bf16.msra.mxu0 %v1203
        %1253 = vmatprep.subr.bf16.mxu0 0
        %1254 = vmatpush2.bf16.msra.mxu0 %v1202
        %1255 = vmatprep.subr.bf16.mxu0 0
        %1256 = vmatpush2.bf16.msra.mxu0 %v1201
        %1257 = vmatprep.mubr.bf16.mxu0 %v1089
        %1258 = vmatmul.mubr.bf16.gmra.mxu0 %v1088
        %v1259 = vpop.f32.mrf.mxu0
        %v1260 = vadd.f32 %v1127, %v1259
        %v1261 = vpop.f32.mrf.mxu0
        %v1262 = vpop.f32.mrf.mxu0
        %v1263 = vpop.f32.mrf.mxu0
        %1264 = vdwg.mxu0
        %1265 = vst [vmem:[%s361] sm:$0xff] %v1260
        %p1266 = scmp.lt.s32.totalorder %s23, 3
        %s1267 = scalar_select %p1266, %s23, 3
        %s1268 = smul.addr %s1267, 8
        %s1269 = scalar_lea.vmem %s5, %s1268
        // Predicated region
        $region61: #{multi_label_classifier_forward.1} parent=39 // pred_check
          %p1270 = pneg %p166
        $region62: #{multi_label_classifier_forward.1} parent=39 // pred_check_branch
          %1272 = sbr.rel (%p1270) target = $region64
        $region63: #{multi_label_classifier_forward.1} parent=39 // pred_region
          _
        $region64: #{multi_label_classifier_forward.1} parent=39 // pred_fallthru
          _
      $region40: #{multi_label_classifier_forward.1} parent=5 // pred_fallthru
        _
      %p1273 = scmp.le.s32.totalorder 2, %s18
      // Predicated region
      $region65: #{multi_label_classifier_forward.1} parent=5 // pred_check
        %p1274 = pneg %p1273
      $region66: #{multi_label_classifier_forward.1} parent=5 // pred_check_branch
        %1276 = sbr.rel (%p1274) target = $region68
      $region67: #{multi_label_classifier_forward.1} parent=5 // pred_region
        %s1277 = ssub.s32 %s18, 2
        // Predicated region
        $region69: #{multi_label_classifier_forward.1} parent=67 // pred_check
          %p1278 = pneg %p172
        $region70: #{multi_label_classifier_forward.1} parent=67 // pred_check_branch
          %1280 = sbr.rel (%p1278) target = $region72
        $region71: #{multi_label_classifier_forward.1} parent=67 // pred_region
          %p1281 = scmp.lt.s32.totalorder %s24, 3
          %s1282 = scalar_select %p1281, %s24, 3
          %s1283 = smul.addr %s1282, 8
          %s1284 = scalar_lea.vmem %s5, %s1283
        $region72: #{multi_label_classifier_forward.1} parent=67 // pred_fallthru
          _
      $region68: #{multi_label_classifier_forward.1} parent=5 // pred_fallthru
        _
    $region6: #{multi_label_classifier_forward.1} parent=1 // loop_footer
      %s22 = sadd.s32 1, %s18
    $region7: #{multi_label_classifier_forward.1} parent=1 // loop_footer_branch
      %17 = sbr.rel target = $region3
    $region8: #{multi_label_classifier_forward.1} parent=1 // loop_exit
      _
    %1285 = vsyncpa [#allocation3], 1
    %s1286 = scalar_lea.sflag [#allocation3], 1
    %1287 = vsyncpa %s1286, 1
    %1288 = vsyncpa [#allocation5], 1
    %s1289 = scalar_lea.sflag [#allocation5], 1
    %1290 = vsyncpa %s1289, 1
    %1291 = vsyncpa [#allocation8], 1
    %s1292 = scalar_lea.sflag [#allocation8], 1
    %1293 = vsyncpa %s1292, 1

</llo_original>
